<compile_context>
chip_gen: v7x
topology: tpu7x:2x2x1
jax: 0.10.0
libtpu: 0.0.40
codegen_flags: <defaults>
</compile_context>

<pallas_src>
import functools

import jax
import jax.numpy as jnp
from jax.experimental import pallas as pl
from jax.experimental.pallas import tpu as pltpu


def _round_up(n, m):
    return ((n + m - 1) // m) * m


# ----------------------------- kernel ---------------------------------------


def _svae_kernel(
    x_ref, eps_ref,
    we1_ref, be1_ref, we2_ref, be2_ref,
    wmulv_ref, bmulv_ref,           # fused, lane-padded  [mu | logvar] head
    wdc1_ref, bdc1_ref,             # fused decoder[0] || classifier[0], K padded to 128
    wd2c2_ref, bd2c2_ref,           # block-diag(wd2, wc2_pad)
    wd3_ref, bd3_ref,               # decoder output layer, cols padded to 128
    out_ref,
):
    f32 = jnp.float32
    hidden = we1_ref.shape[1]
    lat_pad = eps_ref.shape[1]      # 128-aligned latent width
    in_pad = wd3_ref.shape[1]       # 128-aligned recon width

    def linear(a, w_ref, b_ref):
        return jnp.dot(a, w_ref[...], preferred_element_type=f32) + b_ref[...]

    def relu(a):
        return jnp.maximum(a, 0.0)

    x = x_ref[...]

    # ----- encoder: Linear -> ReLU -> Linear -> ReLU -----
    h = relu(linear(x, we1_ref, be1_ref))
    h = relu(linear(h, we2_ref, be2_ref))

    # ----- fused latent heads: [mu_pad | logvar_pad], each lat_pad lanes -----
    mulv = linear(h, wmulv_ref, bmulv_ref)          # [b, 2*lat_pad]
    mu = mulv[:, :lat_pad]                          # vreg-aligned slice (free)
    logvar = mulv[:, lat_pad:]                      # vreg-aligned slice (free)

    # ----- reparameterize: z = mu + eps * exp(0.5 * logvar) -----
    # Padded latent columns: mu = 0, eps = 0  ->  z = 0 (and wdc1 rows are 0).
    z = mu + eps_ref[...] * jnp.exp(0.5 * logvar)   # [b, lat_pad]

    # ----- fused decoder[0] + classifier[0] (both consume z), K = lat_pad -----
    dc = relu(linear(z, wdc1_ref, bdc1_ref))        # [b, 2*hidden]

    # ----- block-diag fused decoder[1] || classifier head (K = 2*hidden) -----
    dlg = linear(dc, wd2c2_ref, bd2c2_ref)          # [b, hidden + c_pad]
    d2 = relu(dlg[:, :hidden])                      # ReLU only on decoder half
    logits = dlg[:, hidden:]                        # no ReLU on logits

    # ----- decoder output layer -----
    recon = linear(d2, wd3_ref, bd3_ref)            # [b, in_pad]

    # ----- three lane-aligned unmasked stores into the packed output slab -----
    out_ref[:, :in_pad] = recon.astype(out_ref.dtype)
    out_ref[:, in_pad:in_pad + 2 * lat_pad] = mulv.astype(out_ref.dtype)
    out_ref[:, in_pad + 2 * lat_pad:] = logits.astype(out_ref.dtype)


# ----------------------------- wrapper ---------------------------------------


@functools.partial(jax.jit, static_argnames=("block_b",))
def supervised_vae_forward(x, eps, params, *, block_b=1024):
    """Forward pass of SupervisedVAEBase.

    x:   [B, input_dim]  float32
    eps: [B, latent_dim] float32  (the torch.randn_like noise)
    params: dict of weights [in, out] and biases [1, out]
    returns (recon [B, input_dim], mu [B, L], logvar [B, L], logits [B, C])
    """
    f32 = jnp.float32
    B, input_dim = x.shape
    hidden = params["we1"].shape[1]
    latent_dim = params["wmu"].shape[1]
    num_classes = params["wc2"].shape[1]

    lat_pad = _round_up(latent_dim, 128)
    in_pad = _round_up(input_dim, 128)
    c_pad = _round_up(num_classes, 128)

    def pad_cols(a, n):
        return jnp.pad(a, ((0, 0), (0, n - a.shape[1])))

    def pad_rows(a, n):
        return jnp.pad(a, ((0, n - a.shape[0]), (0, 0)))

    # --- fuse + lane-pad parameter slabs once (outside the kernel) ---
    # mu / logvar heads, each padded to lat_pad output columns.
    wmulv = jnp.concatenate(
        [pad_cols(params["wmu"], lat_pad), pad_cols(params["wlv"], lat_pad)], axis=1)
    bmulv = jnp.concatenate(
        [pad_cols(params["bmu"], lat_pad), pad_cols(params["blv"], lat_pad)], axis=1)
    # decoder[0] || classifier[0], contraction rows padded latent -> lat_pad.
    wdc1 = jnp.concatenate(
        [pad_rows(params["wd1"], lat_pad), pad_rows(params["wc1"], lat_pad)], axis=1)
    bdc1 = jnp.concatenate([params["bd1"], params["bc1"]], axis=1)
    # block-diag(wd2, wc2_pad): [2*hidden, hidden + c_pad].
    wc2_p = pad_cols(params["wc2"], c_pad)
    wd2c2 = jnp.block([
        [params["wd2"], jnp.zeros((hidden, c_pad), f32)],
        [jnp.zeros((hidden, hidden), f32), wc2_p],
    ])
    bd2c2 = jnp.concatenate([params["bd2"], pad_cols(params["bc2"], c_pad)], axis=1)
    # decoder output layer, columns padded input_dim -> in_pad.
    wd3 = pad_cols(params["wd3"], in_pad)
    bd3 = pad_cols(params["bd3"], in_pad)

    param_vals = [
        params["we1"], params["be1"], params["we2"], params["be2"],
        wmulv, bmulv, wdc1, bdc1, wd2c2, bd2c2, wd3, bd3,
    ]

    # --- batch tiling: big sublane-filling tiles, but >=2 grid steps when the
    #     batch allows it so v7x can shard the 'parallel' axis over both TCs ---
    half = _round_up(max(-(-B // 2), 8), 8)
    bb = min(block_b, half)
    B_pad = _round_up(B, bb)

    x_p = jnp.pad(x, ((0, B_pad - B), (0, 0)))
    eps_p = jnp.pad(eps, ((0, B_pad - B), (0, lat_pad - latent_dim)))

    out_cols = in_pad + 2 * lat_pad + c_pad        # 512 at default sizes
    grid = (B_pad // bb,)

    def full_spec(arr):
        # whole parameter slab resident in VMEM, identical for every grid step
        return pl.BlockSpec(arr.shape, lambda i: (0, 0))

    in_specs = (
        [pl.BlockSpec((bb, input_dim), lambda i: (i, 0)),
         pl.BlockSpec((bb, lat_pad), lambda i: (i, 0))]
        + [full_spec(p) for p in param_vals]
    )
    out_specs = pl.BlockSpec((bb, out_cols), lambda i: (i, 0))
    out_shape = jax.ShapeDtypeStruct((B_pad, out_cols), f32)

    packed = pl.pallas_call(
        _svae_kernel,
        grid_spec=pltpu.PrefetchScalarGridSpec(
            num_scalar_prefetch=0,
            grid=grid,
            in_specs=in_specs,
            out_specs=out_specs,
        ),
        out_shape=out_shape,
        compiler_params=pltpu.CompilerParams(
            dimension_semantics=("parallel",),
            vmem_limit_bytes=48 * 1024 * 1024,   # safe on v7x's 64 MiB VMEM
        ),
    )(x_p, eps_p, *param_vals)

    recon = packed[:B, :input_dim]
    mu = packed[:B, in_pad:in_pad + latent_dim]
    logvar = packed[:B, in_pad + lat_pad:in_pad + lat_pad + latent_dim]
    logits = packed[:B, in_pad + 2 * lat_pad:in_pad + 2 * lat_pad + num_classes]
    return recon, mu, logvar, logits


# ------------------------- deterministic init --------------------------------


def init_params(key, input_dim, latent_dim, hidden_size, num_classes):
    """PyTorch-nn.Linear-style uniform(-1/sqrt(fan_in), 1/sqrt(fan_in)) init,
    with weights stored as [in_features, out_features]."""
    layer_dims = {
        "e1": (input_dim, hidden_size),
        "e2": (hidden_size, hidden_size),
        "mu": (hidden_size, latent_dim),
        "lv": (hidden_size, latent_dim),
        "d1": (latent_dim, hidden_size),
        "d2": (hidden_size, hidden_size),
        "d3": (hidden_size, input_dim),
        "c1": (latent_dim, hidden_size),
        "c2": (hidden_size, num_classes),
    }
    params = {}
    keys = jax.random.split(key, 2 * len(layer_dims))
    for idx, (name, (fan_in, fan_out)) in enumerate(layer_dims.items()):
        bound = 1.0 / jnp.sqrt(jnp.float32(fan_in))
        wk, bk = keys[2 * idx], keys[2 * idx + 1]
        params["w" + name] = jax.random.uniform(
            wk, (fan_in, fan_out), jnp.float32, minval=-bound, maxval=bound)
        params["b" + name] = jax.random.uniform(
            bk, (1, fan_out), jnp.float32, minval=-bound, maxval=bound)
    return params


# ------------------------- reference (plain JAX) ------------------------------


def reference_forward(x, eps, p):
    relu = lambda a: jnp.maximum(a, 0.0)
    h = relu(x @ p["we1"] + p["be1"])
    h = relu(h @ p["we2"] + p["be2"])
    mu = h @ p["wmu"] + p["bmu"]
    logvar = h @ p["wlv"] + p["blv"]
    z = mu + eps * jnp.exp(0.5 * logvar)
    d = relu(z @ p["wd1"] + p["bd1"])
    d = relu(d @ p["wd2"] + p["bd2"])
    recon = d @ p["wd3"] + p["bd3"]
    c = relu(z @ p["wc1"] + p["bc1"])
    logits = c @ p["wc2"] + p["bc2"]
    return recon, mu, logvar, logits


# ----------------------------------- main -------------------------------------


if __name__ == "__main__":
    import numpy as np

    INPUT_DIM, LATENT_DIM, HIDDEN, NUM_CLASSES = 32, 8, 128, 2

    root = jax.random.PRNGKey(0)
    k_params, k_x1, k_e1, k_x2, k_e2 = jax.random.split(root, 5)
    params = init_params(k_params, INPUT_DIM, LATENT_DIM, HIDDEN, NUM_CLASSES)

    # --- small test (single whole-batch block, grid=(1,)) ---
    B1 = 8
    x1 = jax.random.normal(k_x1, (B1, INPUT_DIM), jnp.float32)
    eps1 = jax.random.normal(k_e1, (B1, LATENT_DIM), jnp.float32)
    out1 = jax.block_until_ready(supervised_vae_forward(x1, eps1, params))
    ref1 = reference_forward(x1, eps1, params)
    for got, exp in zip(out1, ref1):
        np.testing.assert_allclose(np.asarray(got), np.asarray(exp),
                                   rtol=2e-5, atol=2e-5)

    # --- larger ragged-batch test (padding + 2-step parallel grid) ---
    B2 = 300  # pads to 304 -> grid=(2,), block_b=152 (uses both v7x cores)
    x2 = jax.random.normal(k_x2, (B2, INPUT_DIM), jnp.float32)
    eps2 = jax.random.normal(k_e2, (B2, LATENT_DIM), jnp.float32)
    out2 = jax.block_until_ready(supervised_vae_forward(x2, eps2, params))
    ref2 = reference_forward(x2, eps2, params)
    for got, exp in zip(out2, ref2):
        np.testing.assert_allclose(np.asarray(got), np.asarray(exp),
                                   rtol=2e-5, atol=2e-5)

    recon, mu, logvar, logits = out2
    assert recon.shape == (B2, INPUT_DIM)
    assert mu.shape == (B2, LATENT_DIM)
    assert logvar.shape == (B2, LATENT_DIM)
    assert logits.shape == (B2, NUM_CLASSES)

    print("KERNEL_OK")
</pallas_src>

<mosaic_0001>
module attributes {stable_mosaic.version = 11 : i64} {
  func.func @_svae_kernel(%arg0: i32, %arg1: memref<8x32xf32, #tpu.memory_space<vmem>>, %arg2: memref<8x128xf32, #tpu.memory_space<vmem>>, %arg3: memref<32x128xf32, #tpu.memory_space<vmem>>, %arg4: memref<1x128xf32, #tpu.memory_space<vmem>>, %arg5: memref<128x128xf32, #tpu.memory_space<vmem>>, %arg6: memref<1x128xf32, #tpu.memory_space<vmem>>, %arg7: memref<128x256xf32, #tpu.memory_space<vmem>>, %arg8: memref<1x256xf32, #tpu.memory_space<vmem>>, %arg9: memref<128x256xf32, #tpu.memory_space<vmem>>, %arg10: memref<1x256xf32, #tpu.memory_space<vmem>>, %arg11: memref<256x256xf32, #tpu.memory_space<vmem>>, %arg12: memref<1x256xf32, #tpu.memory_space<vmem>>, %arg13: memref<128x128xf32, #tpu.memory_space<vmem>>, %arg14: memref<1x128xf32, #tpu.memory_space<vmem>>, %arg15: memref<8x512xf32, #tpu.memory_space<vmem>>) attributes {dimension_semantics = [#tpu.dimension_semantics<parallel>], iteration_bounds = array<i64: 1>, scalar_prefetch = 0 : i64, scratch_operands = 0 : i64, tpu.core_type = #tpu.core_type<tc>, window_params = [{transform_indices = @transform_0, window_bounds = array<i64: 8, 32>}, {transform_indices = @transform_1, window_bounds = array<i64: 8, 128>}, {pipeline_mode = #tpu.pipeline_mode<synchronous>, transform_indices = @transform_2, window_bounds = array<i64: 32, 128>}, {pipeline_mode = #tpu.pipeline_mode<synchronous>, transform_indices = @transform_3, window_bounds = array<i64: 1, 128>}, {pipeline_mode = #tpu.pipeline_mode<synchronous>, transform_indices = @transform_4, window_bounds = array<i64: 128, 128>}, {pipeline_mode = #tpu.pipeline_mode<synchronous>, transform_indices = @transform_5, window_bounds = array<i64: 1, 128>}, {pipeline_mode = #tpu.pipeline_mode<synchronous>, transform_indices = @transform_6, window_bounds = array<i64: 128, 256>}, {pipeline_mode = #tpu.pipeline_mode<synchronous>, transform_indices = @transform_7, window_bounds = array<i64: 1, 256>}, {pipeline_mode = #tpu.pipeline_mode<synchronous>, transform_indices = @transform_8, window_bounds = array<i64: 128, 256>}, {pipeline_mode = #tpu.pipeline_mode<synchronous>, transform_indices = @transform_9, window_bounds = array<i64: 1, 256>}, {pipeline_mode = #tpu.pipeline_mode<synchronous>, transform_indices = @transform_10, window_bounds = array<i64: 256, 256>}, {pipeline_mode = #tpu.pipeline_mode<synchronous>, transform_indices = @transform_11, window_bounds = array<i64: 1, 256>}, {pipeline_mode = #tpu.pipeline_mode<synchronous>, transform_indices = @transform_12, window_bounds = array<i64: 128, 128>}, {pipeline_mode = #tpu.pipeline_mode<synchronous>, transform_indices = @transform_13, window_bounds = array<i64: 1, 128>}, {transform_indices = @transform_14, window_bounds = array<i64: 8, 512>}]} {
    %c0 = arith.constant 0 : index
    %c0_0 = arith.constant 0 : index
    %0 = vector.load %arg1[%c0, %c0_0] : memref<8x32xf32, #tpu.memory_space<vmem>>, vector<8x32xf32>
    %c0_1 = arith.constant 0 : index
    %c0_2 = arith.constant 0 : index
    %1 = vector.load %arg3[%c0_1, %c0_2] : memref<32x128xf32, #tpu.memory_space<vmem>>, vector<32x128xf32>
    %cst = arith.constant dense<0.000000e+00> : vector<8x128xf32>
    %2 = tpu.matmul %0, %1, %cst {dimension_numbers = #tpu.dot_dimension_numbers<[1], [0], [0], [1], [0, 0, 1, 1], [], []>} : vector<8x32xf32>, vector<32x128xf32>, vector<8x128xf32> -> vector<8x128xf32>
    %c0_3 = arith.constant 0 : index
    %c0_4 = arith.constant 0 : index
    %3 = vector.load %arg4[%c0_3, %c0_4] : memref<1x128xf32, #tpu.memory_space<vmem>>, vector<1x128xf32>
    %4 = vector.broadcast %3 : vector<1x128xf32> to vector<8x128xf32>
    %5 = arith.addf %2, %4 : vector<8x128xf32>
    %cst_5 = arith.constant 0.000000e+00 : f32
    %6 = vector.broadcast %cst_5 : f32 to vector<8x128xf32>
    %7 = arith.maximumf %5, %6 : vector<8x128xf32>
    %c0_6 = arith.constant 0 : index
    %c0_7 = arith.constant 0 : index
    %8 = vector.load %arg5[%c0_6, %c0_7] : memref<128x128xf32, #tpu.memory_space<vmem>>, vector<128x128xf32>
    %cst_8 = arith.constant dense<0.000000e+00> : vector<8x128xf32>
    %9 = tpu.matmul %7, %8, %cst_8 {dimension_numbers = #tpu.dot_dimension_numbers<[1], [0], [0], [1], [0, 0, 1, 1], [], []>} : vector<8x128xf32>, vector<128x128xf32>, vector<8x128xf32> -> vector<8x128xf32>
    %c0_9 = arith.constant 0 : index
    %c0_10 = arith.constant 0 : index
    %10 = vector.load %arg6[%c0_9, %c0_10] : memref<1x128xf32, #tpu.memory_space<vmem>>, vector<1x128xf32>
    %11 = vector.broadcast %10 : vector<1x128xf32> to vector<8x128xf32>
    %12 = arith.addf %9, %11 : vector<8x128xf32>
    %cst_11 = arith.constant 0.000000e+00 : f32
    %13 = vector.broadcast %cst_11 : f32 to vector<8x128xf32>
    %14 = arith.maximumf %12, %13 : vector<8x128xf32>
    %c0_12 = arith.constant 0 : index
    %c0_13 = arith.constant 0 : index
    %15 = vector.load %arg7[%c0_12, %c0_13] : memref<128x256xf32, #tpu.memory_space<vmem>>, vector<128x256xf32>
    %cst_14 = arith.constant dense<0.000000e+00> : vector<8x256xf32>
    %16 = tpu.matmul %14, %15, %cst_14 {dimension_numbers = #tpu.dot_dimension_numbers<[1], [0], [0], [1], [0, 0, 1, 1], [], []>} : vector<8x128xf32>, vector<128x256xf32>, vector<8x256xf32> -> vector<8x256xf32>
    %c0_15 = arith.constant 0 : index
    %c0_16 = arith.constant 0 : index
    %17 = vector.load %arg8[%c0_15, %c0_16] : memref<1x256xf32, #tpu.memory_space<vmem>>, vector<1x256xf32>
    %18 = vector.broadcast %17 : vector<1x256xf32> to vector<8x256xf32>
    %19 = arith.addf %16, %18 : vector<8x256xf32>
    %20 = vector.extract_strided_slice %19 {offsets = [0, 0], sizes = [8, 128], strides = [1, 1]} : vector<8x256xf32> to vector<8x128xf32>
    %21 = vector.extract_strided_slice %19 {offsets = [0, 128], sizes = [8, 128], strides = [1, 1]} : vector<8x256xf32> to vector<8x128xf32>
    %c0_17 = arith.constant 0 : index
    %c0_18 = arith.constant 0 : index
    %22 = vector.load %arg2[%c0_17, %c0_18] : memref<8x128xf32, #tpu.memory_space<vmem>>, vector<8x128xf32>
    %cst_19 = arith.constant 5.000000e-01 : f32
    %23 = vector.broadcast %cst_19 : f32 to vector<8x128xf32>
    %24 = arith.mulf %23, %21 : vector<8x128xf32>
    %25 = math.exp %24 : vector<8x128xf32>
    %26 = arith.mulf %22, %25 : vector<8x128xf32>
    %27 = arith.addf %20, %26 : vector<8x128xf32>
    %c0_20 = arith.constant 0 : index
    %c0_21 = arith.constant 0 : index
    %28 = vector.load %arg9[%c0_20, %c0_21] : memref<128x256xf32, #tpu.memory_space<vmem>>, vector<128x256xf32>
    %cst_22 = arith.constant dense<0.000000e+00> : vector<8x256xf32>
    %29 = tpu.matmul %27, %28, %cst_22 {dimension_numbers = #tpu.dot_dimension_numbers<[1], [0], [0], [1], [0, 0, 1, 1], [], []>} : vector<8x128xf32>, vector<128x256xf32>, vector<8x256xf32> -> vector<8x256xf32>
    %c0_23 = arith.constant 0 : index
    %c0_24 = arith.constant 0 : index
    %30 = vector.load %arg10[%c0_23, %c0_24] : memref<1x256xf32, #tpu.memory_space<vmem>>, vector<1x256xf32>
    %31 = vector.broadcast %30 : vector<1x256xf32> to vector<8x256xf32>
    %32 = arith.addf %29, %31 : vector<8x256xf32>
    %cst_25 = arith.constant 0.000000e+00 : f32
    %33 = vector.broadcast %cst_25 : f32 to vector<8x256xf32>
    %34 = arith.maximumf %32, %33 : vector<8x256xf32>
    %c0_26 = arith.constant 0 : index
    %c0_27 = arith.constant 0 : index
    %35 = vector.load %arg11[%c0_26, %c0_27] : memref<256x256xf32, #tpu.memory_space<vmem>>, vector<256x256xf32>
    %cst_28 = arith.constant dense<0.000000e+00> : vector<8x256xf32>
    %36 = tpu.matmul %34, %35, %cst_28 {dimension_numbers = #tpu.dot_dimension_numbers<[1], [0], [0], [1], [0, 0, 1, 1], [], []>} : vector<8x256xf32>, vector<256x256xf32>, vector<8x256xf32> -> vector<8x256xf32>
    %c0_29 = arith.constant 0 : index
    %c0_30 = arith.constant 0 : index
    %37 = vector.load %arg12[%c0_29, %c0_30] : memref<1x256xf32, #tpu.memory_space<vmem>>, vector<1x256xf32>
    %38 = vector.broadcast %37 : vector<1x256xf32> to vector<8x256xf32>
    %39 = arith.addf %36, %38 : vector<8x256xf32>
    %40 = vector.extract_strided_slice %39 {offsets = [0, 0], sizes = [8, 128], strides = [1, 1]} : vector<8x256xf32> to vector<8x128xf32>
    %cst_31 = arith.constant 0.000000e+00 : f32
    %41 = vector.broadcast %cst_31 : f32 to vector<8x128xf32>
    %42 = arith.maximumf %40, %41 : vector<8x128xf32>
    %43 = vector.extract_strided_slice %39 {offsets = [0, 128], sizes = [8, 128], strides = [1, 1]} : vector<8x256xf32> to vector<8x128xf32>
    %c0_32 = arith.constant 0 : index
    %c0_33 = arith.constant 0 : index
    %44 = vector.load %arg13[%c0_32, %c0_33] : memref<128x128xf32, #tpu.memory_space<vmem>>, vector<128x128xf32>
    %cst_34 = arith.constant dense<0.000000e+00> : vector<8x128xf32>
    %45 = tpu.matmul %42, %44, %cst_34 {dimension_numbers = #tpu.dot_dimension_numbers<[1], [0], [0], [1], [0, 0, 1, 1], [], []>} : vector<8x128xf32>, vector<128x128xf32>, vector<8x128xf32> -> vector<8x128xf32>
    %c0_35 = arith.constant 0 : index
    %c0_36 = arith.constant 0 : index
    %46 = vector.load %arg14[%c0_35, %c0_36] : memref<1x128xf32, #tpu.memory_space<vmem>>, vector<1x128xf32>
    %47 = vector.broadcast %46 : vector<1x128xf32> to vector<8x128xf32>
    %48 = arith.addf %45, %47 : vector<8x128xf32>
    %c0_37 = arith.constant 0 : index
    %c0_38 = arith.constant 0 : index
    %49 = vector.load %arg15[%c0_37, %c0_38] : memref<8x512xf32, #tpu.memory_space<vmem>>, vector<8x128xf32>
    tpu.vector_store %arg15[%c0_37, %c0_38], %48 {strides = array<i32>} : memref<8x512xf32, #tpu.memory_space<vmem>>, vector<8x128xf32>,
    %c0_39 = arith.constant 0 : index
    %c128 = arith.constant 128 : index
    %50 = vector.load %arg15[%c0_39, %c128] : memref<8x512xf32, #tpu.memory_space<vmem>>, vector<8x256xf32>
    tpu.vector_store %arg15[%c0_39, %c128], %19 {strides = array<i32>} : memref<8x512xf32, #tpu.memory_space<vmem>>, vector<8x256xf32>,
    %c0_40 = arith.constant 0 : index
    %c384 = arith.constant 384 : index
    %51 = vector.load %arg15[%c0_40, %c384] : memref<8x512xf32, #tpu.memory_space<vmem>>, vector<8x128xf32>
    tpu.vector_store %arg15[%c0_40, %c384], %43 {strides = array<i32>} : memref<8x512xf32, #tpu.memory_space<vmem>>, vector<8x128xf32>,
    return
  }
  func.func @transform_0(%arg0: i32) -> (i32, i32) {
    %c0_i32 = arith.constant 0 : i32
    %c0_i32_0 = arith.constant 0 : i32
    return %arg0, %c0_i32 : i32, i32
  }
  func.func @transform_1(%arg0: i32) -> (i32, i32) {
    %c0_i32 = arith.constant 0 : i32
    %c0_i32_0 = arith.constant 0 : i32
    return %arg0, %c0_i32 : i32, i32
  }
  func.func @transform_2(%arg0: i32) -> (i32, i32) {
    %c0_i32 = arith.constant 0 : i32
    %c0_i32_0 = arith.constant 0 : i32
    %c0_i32_1 = arith.constant 0 : i32
    return %c0_i32, %c0_i32_0 : i32, i32
  }
  func.func @transform_3(%arg0: i32) -> (i32, i32) {
    %c0_i32 = arith.constant 0 : i32
    %c0_i32_0 = arith.constant 0 : i32
    %c0_i32_1 = arith.constant 0 : i32
    return %c0_i32, %c0_i32_0 : i32, i32
  }
  func.func @transform_4(%arg0: i32) -> (i32, i32) {
    %c0_i32 = arith.constant 0 : i32
    %c0_i32_0 = arith.constant 0 : i32
    %c0_i32_1 = arith.constant 0 : i32
    return %c0_i32, %c0_i32_0 : i32, i32
  }
  func.func @transform_5(%arg0: i32) -> (i32, i32) {
    %c0_i32 = arith.constant 0 : i32
    %c0_i32_0 = arith.constant 0 : i32
    %c0_i32_1 = arith.constant 0 : i32
    return %c0_i32, %c0_i32_0 : i32, i32
  }
  func.func @transform_6(%arg0: i32) -> (i32, i32) {
    %c0_i32 = arith.constant 0 : i32
    %c0_i32_0 = arith.constant 0 : i32
    %c0_i32_1 = arith.constant 0 : i32
    return %c0_i32, %c0_i32_0 : i32, i32
  }
  func.func @transform_7(%arg0: i32) -> (i32, i32) {
    %c0_i32 = arith.constant 0 : i32
    %c0_i32_0 = arith.constant 0 : i32
    %c0_i32_1 = arith.constant 0 : i32
    return %c0_i32, %c0_i32_0 : i32, i32
  }
  func.func @transform_8(%arg0: i32) -> (i32, i32) {
    %c0_i32 = arith.constant 0 : i32
    %c0_i32_0 = arith.constant 0 : i32
    %c0_i32_1 = arith.constant 0 : i32
    return %c0_i32, %c0_i32_0 : i32, i32
  }
  func.func @transform_9(%arg0: i32) -> (i32, i32) {
    %c0_i32 = arith.constant 0 : i32
    %c0_i32_0 = arith.constant 0 : i32
    %c0_i32_1 = arith.constant 0 : i32
    return %c0_i32, %c0_i32_0 : i32, i32
  }
  func.func @transform_10(%arg0: i32) -> (i32, i32) {
    %c0_i32 = arith.constant 0 : i32
    %c0_i32_0 = arith.constant 0 : i32
    %c0_i32_1 = arith.constant 0 : i32
    return %c0_i32, %c0_i32_0 : i32, i32
  }
  func.func @transform_11(%arg0: i32) -> (i32, i32) {
    %c0_i32 = arith.constant 0 : i32
    %c0_i32_0 = arith.constant 0 : i32
    %c0_i32_1 = arith.constant 0 : i32
    return %c0_i32, %c0_i32_0 : i32, i32
  }
  func.func @transform_12(%arg0: i32) -> (i32, i32) {
    %c0_i32 = arith.constant 0 : i32
    %c0_i32_0 = arith.constant 0 : i32
    %c0_i32_1 = arith.constant 0 : i32
    return %c0_i32, %c0_i32_0 : i32, i32
  }
  func.func @transform_13(%arg0: i32) -> (i32, i32) {
    %c0_i32 = arith.constant 0 : i32
    %c0_i32_0 = arith.constant 0 : i32
    %c0_i32_1 = arith.constant 0 : i32
    return %c0_i32, %c0_i32_0 : i32, i32
  }
  func.func @transform_14(%arg0: i32) -> (i32, i32) {
    %c0_i32 = arith.constant 0 : i32
    %c0_i32_0 = arith.constant 0 : i32
    return %arg0, %c0_i32 : i32, i32
  }
}

</mosaic_0001>

<llo_original>
// kernel: supervised_vae_forward.1
$region0: #{supervised_vae_forward.1}
  #allocation0 [shape = 'u32[]', space=smem, size = 0x4, offset = 0x4, fixed_abs, tag = 'smem constant byte address 0x4 - core index']
  #allocation1 [shape = 'u32[144,128]{1,0:T(1,128)}', space=vmem, size = 0x12000, scoped, tag = 'internal scratch']
  %s0 = inlined_call_operand.vmem [shape: f32[8,32], index: 0, kind: input, shape index: {}]
  %s1 = inlined_call_operand.vmem [shape: f32[8,128], index: 1, kind: input, shape index: {}]
  %s2 = inlined_call_operand.vmem [shape: f32[32,128], index: 2, kind: input, shape index: {}]
  %s3 = inlined_call_operand.vmem [shape: f32[1,128], index: 3, kind: input, shape index: {}]
  %s4 = inlined_call_operand.vmem [shape: f32[128,128], index: 4, kind: input, shape index: {}]
  %s5 = inlined_call_operand.vmem [shape: f32[1,128], index: 5, kind: input, shape index: {}]
  %s6 = inlined_call_operand.vmem [shape: f32[128,256], index: 6, kind: input, shape index: {}]
  %s7 = inlined_call_operand.vmem [shape: f32[1,256], index: 7, kind: input, shape index: {}]
  %s8 = inlined_call_operand.vmem [shape: f32[128,256], index: 8, kind: input, shape index: {}]
  %s9 = inlined_call_operand.vmem [shape: f32[1,256], index: 9, kind: input, shape index: {}]
  %s10 = inlined_call_operand.vmem [shape: f32[256,256], index: 10, kind: input, shape index: {}]
  %s11 = inlined_call_operand.vmem [shape: f32[1,256], index: 11, kind: input, shape index: {}]
  %s12 = inlined_call_operand.vmem [shape: f32[128,128], index: 12, kind: input, shape index: {}]
  %s13 = inlined_call_operand.vmem [shape: f32[1,128], index: 13, kind: input, shape index: {}]
  %s14 = inlined_call_operand.vmem [shape: f32[8,512], index: 14, kind: output, shape index: {}]
  %s15 = sld [smem:[#allocation0]]
  $region66: #{supervised_vae_forward.1} parent=0
    _
  %s17 = ssub.s32 1, %s15
  %s18 = scalar_select 0, %s17, %s15
  // Predicated region
  $region2: #{supervised_vae_forward.1} parent=0 // pred_check
    _
  $region3: #{supervised_vae_forward.1} parent=0 // pred_check_branch
    %20 = sbr.rel (0) target = $region5
  $region4: #{supervised_vae_forward.1} parent=0 // pred_region
    _
  $region5: #{supervised_vae_forward.1} parent=0 // pred_fallthru
    _
  // Predicated region
  $region6: #{supervised_vae_forward.1} parent=0 // pred_check
    _
  $region7: #{supervised_vae_forward.1} parent=0 // pred_check_branch
    %22 = sbr.rel (0) target = $region9
  $region8: #{supervised_vae_forward.1} parent=0 // pred_region
    _
  $region9: #{supervised_vae_forward.1} parent=0 // pred_fallthru
    _
  // Predicated region
  $region10: #{supervised_vae_forward.1} parent=0 // pred_check
    _
  $region11: #{supervised_vae_forward.1} parent=0 // pred_check_branch
    %24 = sbr.rel (0) target = $region13
  $region12: #{supervised_vae_forward.1} parent=0 // pred_region
    _
  $region13: #{supervised_vae_forward.1} parent=0 // pred_fallthru
    _
  // Predicated region
  $region14: #{supervised_vae_forward.1} parent=0 // pred_check
    _
  $region15: #{supervised_vae_forward.1} parent=0 // pred_check_branch
    %26 = sbr.rel (0) target = $region17
  $region16: #{supervised_vae_forward.1} parent=0 // pred_region
    _
  $region17: #{supervised_vae_forward.1} parent=0 // pred_fallthru
    _
  // Predicated region
  $region18: #{supervised_vae_forward.1} parent=0 // pred_check
    _
  $region19: #{supervised_vae_forward.1} parent=0 // pred_check_branch
    %28 = sbr.rel (0) target = $region21
  $region20: #{supervised_vae_forward.1} parent=0 // pred_region
    _
  $region21: #{supervised_vae_forward.1} parent=0 // pred_fallthru
    _
  // Predicated region
  $region22: #{supervised_vae_forward.1} parent=0 // pred_check
    _
  $region23: #{supervised_vae_forward.1} parent=0 // pred_check_branch
    %30 = sbr.rel (0) target = $region25
  $region24: #{supervised_vae_forward.1} parent=0 // pred_region
    _
  $region25: #{supervised_vae_forward.1} parent=0 // pred_fallthru
    _
  // Predicated region
  $region26: #{supervised_vae_forward.1} parent=0 // pred_check
    _
  $region27: #{supervised_vae_forward.1} parent=0 // pred_check_branch
    %32 = sbr.rel (0) target = $region29
  $region28: #{supervised_vae_forward.1} parent=0 // pred_region
    _
  $region29: #{supervised_vae_forward.1} parent=0 // pred_fallthru
    _
  // Predicated region
  $region30: #{supervised_vae_forward.1} parent=0 // pred_check
    _
  $region31: #{supervised_vae_forward.1} parent=0 // pred_check_branch
    %34 = sbr.rel (0) target = $region33
  $region32: #{supervised_vae_forward.1} parent=0 // pred_region
    _
  $region33: #{supervised_vae_forward.1} parent=0 // pred_fallthru
    _
  // Predicated region
  $region34: #{supervised_vae_forward.1} parent=0 // pred_check
    _
  $region35: #{supervised_vae_forward.1} parent=0 // pred_check_branch
    %36 = sbr.rel (0) target = $region37
  $region36: #{supervised_vae_forward.1} parent=0 // pred_region
    _
  $region37: #{supervised_vae_forward.1} parent=0 // pred_fallthru
    _
  // Predicated region
  $region38: #{supervised_vae_forward.1} parent=0 // pred_check
    _
  $region39: #{supervised_vae_forward.1} parent=0 // pred_check_branch
    %38 = sbr.rel (0) target = $region41
  $region40: #{supervised_vae_forward.1} parent=0 // pred_region
    _
  $region41: #{supervised_vae_forward.1} parent=0 // pred_fallthru
    _
  // Predicated region
  $region42: #{supervised_vae_forward.1} parent=0 // pred_check
    _
  $region43: #{supervised_vae_forward.1} parent=0 // pred_check_branch
    %40 = sbr.rel (0) target = $region45
  $region44: #{supervised_vae_forward.1} parent=0 // pred_region
    _
  $region45: #{supervised_vae_forward.1} parent=0 // pred_fallthru
    _
  // Predicated region
  $region46: #{supervised_vae_forward.1} parent=0 // pred_check
    _
  $region47: #{supervised_vae_forward.1} parent=0 // pred_check_branch
    %42 = sbr.rel (0) target = $region49
  $region48: #{supervised_vae_forward.1} parent=0 // pred_region
    _
  $region49: #{supervised_vae_forward.1} parent=0 // pred_fallthru
    _
  // Predicated region
  $region50: #{supervised_vae_forward.1} parent=0 // pred_check
    _
  $region51: #{supervised_vae_forward.1} parent=0 // pred_check_branch
    %44 = sbr.rel (0) target = $region53
  $region52: #{supervised_vae_forward.1} parent=0 // pred_region
    _
  $region53: #{supervised_vae_forward.1} parent=0 // pred_fallthru
    _
  // Predicated region
  $region54: #{supervised_vae_forward.1} parent=0 // pred_check
    _
  $region55: #{supervised_vae_forward.1} parent=0 // pred_check_branch
    %46 = sbr.rel (0) target = $region57
  $region56: #{supervised_vae_forward.1} parent=0 // pred_region
    _
  $region57: #{supervised_vae_forward.1} parent=0 // pred_fallthru
    _
  %v47 = vld [vmem:[%s0] sm:$0xff]
  %v48 = vld [vmem:[%s2] sm:$0xff]
  %v49 = vld [vmem:[%s2 + $0x8] sm:$0xff]
  %v50 = vld [vmem:[%s2 + $0x10] sm:$0xff]
  %v51 = vld [vmem:[%s2 + $0x18] sm:$0xff]
  %v52 = vld [vmem:[%s3] sm:$0x1]
  %v54 = vlaneseq
  %v55 = vshrl.u32 %v54, 7
  %v56 = vsub.s32 0, %v55
  %v57 = vrot.slane %v52, %v56
  %vm59 = vcmask 261120
  %v61 = vsel %vm59, %v47, 0
  %63 = vmatprep.subr.mxu0 0.0
  %64 = vmatpush1.msra.mxu0 %v48
  %65 = vmatprep.subr.mxu0 0.0
  %66 = vmatpush1.msra.mxu0 %v49
  %67 = vmatprep.subr.mxu0 0.0
  %68 = vmatpush1.msra.mxu0 %v50
  %69 = vmatprep.subr.mxu0 0.0
  %70 = vmatpush1.msra.mxu0 %v51
  %71 = vmatprep.subr.mxu0 0.0
  %72 = vmatpush1.msra.mxu0 0.0
  %73 = vmatprep.subr.mxu0 0.0
  %74 = vmatpush1.msra.mxu0 0.0
  %75 = vmatprep.subr.mxu0 0.0
  %76 = vmatpush1.msra.mxu0 0.0
  %77 = vmatprep.subr.mxu0 0.0
  %78 = vmatpush1.msra.mxu0 0.0
  %79 = vmatprep.subr.mxu0 0.0
  %80 = vmatpush1.msra.mxu0 0.0
  %81 = vmatprep.subr.mxu0 0.0
  %82 = vmatpush1.msra.mxu0 0.0
  %83 = vmatprep.subr.mxu0 0.0
  %84 = vmatpush1.msra.mxu0 0.0
  %85 = vmatprep.subr.mxu0 0.0
  %86 = vmatpush1.msra.mxu0 0.0
  %87 = vmatprep.subr.mxu0 0.0
  %88 = vmatpush1.msra.mxu0 0.0
  %89 = vmatprep.subr.mxu0 0.0
  %90 = vmatpush1.msra.mxu0 0.0
  %91 = vmatprep.subr.mxu0 0.0
  %92 = vmatpush1.msra.mxu0 0.0
  %93 = vmatprep.subr.mxu0 0.0
  %94 = vmatpush1.msra.mxu0 0.0
  %95 = vmatprep.subr.mxu0 0.0
  %96 = vmatpush1.msra.mxu0 0.0
  %97 = vmatprep.subr.mxu0 0.0
  %98 = vmatpush1.msra.mxu0 0.0
  %99 = vmatprep.subr.mxu0 0.0
  %100 = vmatpush1.msra.mxu0 0.0
  %101 = vmatprep.subr.mxu0 0.0
  %102 = vmatpush1.msra.mxu0 0.0
  %103 = vmatprep.subr.mxu0 0.0
  %104 = vmatpush1.msra.mxu0 0.0
  %105 = vmatprep.subr.mxu0 0.0
  %106 = vmatpush1.msra.mxu0 0.0
  %107 = vmatprep.subr.mxu0 0.0
  %108 = vmatpush1.msra.mxu0 0.0
  %109 = vmatprep.subr.mxu0 0.0
  %110 = vmatpush1.msra.mxu0 0.0
  %111 = vmatprep.subr.mxu0 0.0
  %112 = vmatpush1.msra.mxu0 0.0
  %113 = vmatprep.subr.mxu0 0.0
  %114 = vmatpush1.msra.mxu0 0.0
  %115 = vmatprep.subr.mxu0 0.0
  %116 = vmatpush1.msra.mxu0 0.0
  %117 = vmatprep.subr.mxu0 0.0
  %118 = vmatpush1.msra.mxu0 0.0
  %119 = vmatprep.subr.mxu0 0.0
  %120 = vmatpush1.msra.mxu0 0.0
  %121 = vmatprep.subr.mxu0 0.0
  %122 = vmatpush1.msra.mxu0 0.0
  %123 = vmatprep.subr.mxu0 0.0
  %124 = vmatpush1.msra.mxu0 0.0
  %125 = vmatprep.subr.mxu0 0.0
  %126 = vmatpush1.msra.mxu0 0.0
  %127 = vmatprep.mubr.f32.mxu0 0.0
  %128 = vmatmul.mubr.f32.gmra.mrb[0].mxu0 %v61
  %v129 = vpop.f32.mrb[0].mxu0
  %v130 = vadd.f32 %v57, %v129
  %v131 = vpop.f32.mrb[0].mxu0
  %132 = vdwg.mxu0
  %v133 = vmax.f32 %v130, 0.0
  %v134 = vld [vmem:[%s4] sm:$0xff]
  %v135 = vld [vmem:[%s4 + $0x8] sm:$0xff]
  %v136 = vld [vmem:[%s4 + $0x10] sm:$0xff]
  %v137 = vld [vmem:[%s4 + $0x18] sm:$0xff]
  %v138 = vld [vmem:[%s4 + $0x20] sm:$0xff]
  %v139 = vld [vmem:[%s4 + $0x28] sm:$0xff]
  %v140 = vld [vmem:[%s4 + $0x30] sm:$0xff]
  %v141 = vld [vmem:[%s4 + $0x38] sm:$0xff]
  %v142 = vld [vmem:[%s4 + $0x40] sm:$0xff]
  %v143 = vld [vmem:[%s4 + $0x48] sm:$0xff]
  %v144 = vld [vmem:[%s4 + $0x50] sm:$0xff]
  %v145 = vld [vmem:[%s4 + $0x58] sm:$0xff]
  %v146 = vld [vmem:[%s4 + $0x60] sm:$0xff]
  %v147 = vld [vmem:[%s4 + $0x68] sm:$0xff]
  %v148 = vld [vmem:[%s4 + $0x70] sm:$0xff]
  %v149 = vld [vmem:[%s4 + $0x78] sm:$0xff]
  %v150 = vld [vmem:[%s5] sm:$0x1]
  %v152 = vlaneseq
  %v153 = vshrl.u32 %v152, 7
  %v154 = vsub.s32 0, %v153
  %v155 = vrot.slane %v150, %v154
  %157 = vmatprep.subr.mxu0 0.0
  %158 = vmatpush1.msra.mxu0 %v134
  %159 = vmatprep.subr.mxu0 0.0
  %160 = vmatpush1.msra.mxu0 %v135
  %161 = vmatprep.subr.mxu0 0.0
  %162 = vmatpush1.msra.mxu0 %v136
  %163 = vmatprep.subr.mxu0 0.0
  %164 = vmatpush1.msra.mxu0 %v137
  %165 = vmatprep.subr.mxu0 0.0
  %166 = vmatpush1.msra.mxu0 %v138
  %167 = vmatprep.subr.mxu0 0.0
  %168 = vmatpush1.msra.mxu0 %v139
  %169 = vmatprep.subr.mxu0 0.0
  %170 = vmatpush1.msra.mxu0 %v140
  %171 = vmatprep.subr.mxu0 0.0
  %172 = vmatpush1.msra.mxu0 %v141
  %173 = vmatprep.subr.mxu0 0.0
  %174 = vmatpush1.msra.mxu0 %v142
  %175 = vmatprep.subr.mxu0 0.0
  %176 = vmatpush1.msra.mxu0 %v143
  %177 = vmatprep.subr.mxu0 0.0
  %178 = vmatpush1.msra.mxu0 %v144
  %179 = vmatprep.subr.mxu0 0.0
  %180 = vmatpush1.msra.mxu0 %v145
  %181 = vmatprep.subr.mxu0 0.0
  %182 = vmatpush1.msra.mxu0 %v146
  %183 = vmatprep.subr.mxu0 0.0
  %184 = vmatpush1.msra.mxu0 %v147
  %185 = vmatprep.subr.mxu0 0.0
  %186 = vmatpush1.msra.mxu0 %v148
  %187 = vmatprep.subr.mxu0 0.0
  %188 = vmatpush1.msra.mxu0 %v149
  %189 = vmatprep.subr.mxu0 0.0
  %190 = vmatpush1.msra.mxu0 0.0
  %191 = vmatprep.subr.mxu0 0.0
  %192 = vmatpush1.msra.mxu0 0.0
  %193 = vmatprep.subr.mxu0 0.0
  %194 = vmatpush1.msra.mxu0 0.0
  %195 = vmatprep.subr.mxu0 0.0
  %196 = vmatpush1.msra.mxu0 0.0
  %197 = vmatprep.subr.mxu0 0.0
  %198 = vmatpush1.msra.mxu0 0.0
  %199 = vmatprep.subr.mxu0 0.0
  %200 = vmatpush1.msra.mxu0 0.0
  %201 = vmatprep.subr.mxu0 0.0
  %202 = vmatpush1.msra.mxu0 0.0
  %203 = vmatprep.subr.mxu0 0.0
  %204 = vmatpush1.msra.mxu0 0.0
  %205 = vmatprep.subr.mxu0 0.0
  %206 = vmatpush1.msra.mxu0 0.0
  %207 = vmatprep.subr.mxu0 0.0
  %208 = vmatpush1.msra.mxu0 0.0
  %209 = vmatprep.subr.mxu0 0.0
  %210 = vmatpush1.msra.mxu0 0.0
  %211 = vmatprep.subr.mxu0 0.0
  %212 = vmatpush1.msra.mxu0 0.0
  %213 = vmatprep.subr.mxu0 0.0
  %214 = vmatpush1.msra.mxu0 0.0
  %215 = vmatprep.subr.mxu0 0.0
  %216 = vmatpush1.msra.mxu0 0.0
  %217 = vmatprep.subr.mxu0 0.0
  %218 = vmatpush1.msra.mxu0 0.0
  %219 = vmatprep.subr.mxu0 0.0
  %220 = vmatpush1.msra.mxu0 0.0
  %221 = vmatprep.mubr.f32.mxu0 0.0
  %222 = vmatmul.mubr.f32.gmra.mrb[0].mxu0 %v133
  %v223 = vpop.f32.mrb[0].mxu0
  %v224 = vadd.f32 %v155, %v223
  %v225 = vpop.f32.mrb[0].mxu0
  %226 = vdwg.mxu0
  %v227 = vmax.f32 %v224, 0.0
  %v228 = vld [vmem:[%s6] sm:$0xff]
  %v229 = vld [vmem:[%s6 + $0x8] sm:$0xff]
  %v230 = vld [vmem:[%s6 + $0x10] sm:$0xff]
  %v231 = vld [vmem:[%s6 + $0x18] sm:$0xff]
  %v232 = vld [vmem:[%s6 + $0x20] sm:$0xff]
  %v233 = vld [vmem:[%s6 + $0x28] sm:$0xff]
  %v234 = vld [vmem:[%s6 + $0x30] sm:$0xff]
  %v235 = vld [vmem:[%s6 + $0x38] sm:$0xff]
  %v236 = vld [vmem:[%s6 + $0x40] sm:$0xff]
  %v237 = vld [vmem:[%s6 + $0x48] sm:$0xff]
  %v238 = vld [vmem:[%s6 + $0x50] sm:$0xff]
  %v239 = vld [vmem:[%s6 + $0x58] sm:$0xff]
  %v240 = vld [vmem:[%s6 + $0x60] sm:$0xff]
  %v241 = vld [vmem:[%s6 + $0x68] sm:$0xff]
  %v242 = vld [vmem:[%s6 + $0x70] sm:$0xff]
  %v243 = vld [vmem:[%s6 + $0x78] sm:$0xff]
  %v244 = vld [vmem:[%s6 + $0x80] sm:$0xff]
  %v245 = vld [vmem:[%s6 + $0x88] sm:$0xff]
  %v246 = vld [vmem:[%s6 + $0x90] sm:$0xff]
  %v247 = vld [vmem:[%s6 + $0x98] sm:$0xff]
  %v248 = vld [vmem:[%s6 + $0xa0] sm:$0xff]
  %v249 = vld [vmem:[%s6 + $0xa8] sm:$0xff]
  %v250 = vld [vmem:[%s6 + $0xb0] sm:$0xff]
  %v251 = vld [vmem:[%s6 + $0xb8] sm:$0xff]
  %v252 = vld [vmem:[%s6 + $0xc0] sm:$0xff]
  %v253 = vld [vmem:[%s6 + $0xc8] sm:$0xff]
  %v254 = vld [vmem:[%s6 + $0xd0] sm:$0xff]
  %v255 = vld [vmem:[%s6 + $0xd8] sm:$0xff]
  %v256 = vld [vmem:[%s6 + $0xe0] sm:$0xff]
  %v257 = vld [vmem:[%s6 + $0xe8] sm:$0xff]
  %v258 = vld [vmem:[%s6 + $0xf0] sm:$0xff]
  %v259 = vld [vmem:[%s6 + $0xf8] sm:$0xff]
  %v260 = vld [vmem:[%s7] sm:$0x3]
  %v262 = vlaneseq
  %v263 = vshrl.u32 %v262, 7
  %v264 = vsub.s32 0, %v263
  %v265 = vrot.slane %v260, %v264
  %v266 = vlaneseq
  %v267 = vshrl.u32 %v266, 7
  %v268 = vsub.s32 1, %v267
  %v269 = vrot.slane %v260, %v268
  %272 = vmatprep.subr.mxu0 %v229
  %273 = vmatpush1.msra.mxu0 %v228
  %274 = vmatprep.subr.mxu0 %v231
  %275 = vmatpush1.msra.mxu0 %v230
  %276 = vmatprep.subr.mxu0 %v233
  %277 = vmatpush1.msra.mxu0 %v232
  %278 = vmatprep.subr.mxu0 %v235
  %279 = vmatpush1.msra.mxu0 %v234
  %280 = vmatprep.subr.mxu0 %v237
  %281 = vmatpush1.msra.mxu0 %v236
  %282 = vmatprep.subr.mxu0 %v239
  %283 = vmatpush1.msra.mxu0 %v238
  %284 = vmatprep.subr.mxu0 %v241
  %285 = vmatpush1.msra.mxu0 %v240
  %286 = vmatprep.subr.mxu0 %v243
  %287 = vmatpush1.msra.mxu0 %v242
  %288 = vmatprep.subr.mxu0 %v245
  %289 = vmatpush1.msra.mxu0 %v244
  %290 = vmatprep.subr.mxu0 %v247
  %291 = vmatpush1.msra.mxu0 %v246
  %292 = vmatprep.subr.mxu0 %v249
  %293 = vmatpush1.msra.mxu0 %v248
  %294 = vmatprep.subr.mxu0 %v251
  %295 = vmatpush1.msra.mxu0 %v250
  %296 = vmatprep.subr.mxu0 %v253
  %297 = vmatpush1.msra.mxu0 %v252
  %298 = vmatprep.subr.mxu0 %v255
  %299 = vmatpush1.msra.mxu0 %v254
  %300 = vmatprep.subr.mxu0 %v257
  %301 = vmatpush1.msra.mxu0 %v256
  %302 = vmatprep.subr.mxu0 %v259
  %303 = vmatpush1.msra.mxu0 %v258
  %304 = vmatprep.subr.mxu0 0.0
  %305 = vmatpush1.msra.mxu0 0.0
  %306 = vmatprep.subr.mxu0 0.0
  %307 = vmatpush1.msra.mxu0 0.0
  %308 = vmatprep.subr.mxu0 0.0
  %309 = vmatpush1.msra.mxu0 0.0
  %310 = vmatprep.subr.mxu0 0.0
  %311 = vmatpush1.msra.mxu0 0.0
  %312 = vmatprep.subr.mxu0 0.0
  %313 = vmatpush1.msra.mxu0 0.0
  %314 = vmatprep.subr.mxu0 0.0
  %315 = vmatpush1.msra.mxu0 0.0
  %316 = vmatprep.subr.mxu0 0.0
  %317 = vmatpush1.msra.mxu0 0.0
  %318 = vmatprep.subr.mxu0 0.0
  %319 = vmatpush1.msra.mxu0 0.0
  %320 = vmatprep.subr.mxu0 0.0
  %321 = vmatpush1.msra.mxu0 0.0
  %322 = vmatprep.subr.mxu0 0.0
  %323 = vmatpush1.msra.mxu0 0.0
  %324 = vmatprep.subr.mxu0 0.0
  %325 = vmatpush1.msra.mxu0 0.0
  %326 = vmatprep.subr.mxu0 0.0
  %327 = vmatpush1.msra.mxu0 0.0
  %328 = vmatprep.subr.mxu0 0.0
  %329 = vmatpush1.msra.mxu0 0.0
  %330 = vmatprep.subr.mxu0 0.0
  %331 = vmatpush1.msra.mxu0 0.0
  %332 = vmatprep.subr.mxu0 0.0
  %333 = vmatpush1.msra.mxu0 0.0
  %334 = vmatprep.subr.mxu0 0.0
  %335 = vmatpush1.msra.mxu0 0.0
  %336 = vmatprep.mubr.f32.mxu0 0.0
  %337 = vmatmul.mubr.f32.gmra.mrb[0].mxu0 %v227
  %v338 = vpop.f32.mrb[0].mxu0
  %v339 = vadd.f32 %v265, %v338
  %v340 = vpop.f32.mrb[0].mxu0
  %v341 = vadd.f32 %v269, %v340
  %342 = vdwg.mxu0
  %v343 = vld [vmem:[%s1] sm:$0xff]
  %v344 = vmul.f32 %v341, 0.5
  %v345 = vmul.f32 %v344, 1.442695
  %v346 = vpow.pop %v345
  %v347 = vmul.f32 %v343, %v346
  %v348 = vadd.f32 %v339, %v347
  %v349 = vld [vmem:[%s8] sm:$0xff]
  %v350 = vld [vmem:[%s8 + $0x8] sm:$0xff]
  %v351 = vld [vmem:[%s8 + $0x10] sm:$0xff]
  %v352 = vld [vmem:[%s8 + $0x18] sm:$0xff]
  %v353 = vld [vmem:[%s8 + $0x20] sm:$0xff]
  %v354 = vld [vmem:[%s8 + $0x28] sm:$0xff]
  %v355 = vld [vmem:[%s8 + $0x30] sm:$0xff]
  %v356 = vld [vmem:[%s8 + $0x38] sm:$0xff]
  %v357 = vld [vmem:[%s8 + $0x40] sm:$0xff]
  %v358 = vld [vmem:[%s8 + $0x48] sm:$0xff]
  %v359 = vld [vmem:[%s8 + $0x50] sm:$0xff]
  %v360 = vld [vmem:[%s8 + $0x58] sm:$0xff]
  %v361 = vld [vmem:[%s8 + $0x60] sm:$0xff]
  %v362 = vld [vmem:[%s8 + $0x68] sm:$0xff]
  %v363 = vld [vmem:[%s8 + $0x70] sm:$0xff]
  %v364 = vld [vmem:[%s8 + $0x78] sm:$0xff]
  %v365 = vld [vmem:[%s8 + $0x80] sm:$0xff]
  %v366 = vld [vmem:[%s8 + $0x88] sm:$0xff]
  %v367 = vld [vmem:[%s8 + $0x90] sm:$0xff]
  %v368 = vld [vmem:[%s8 + $0x98] sm:$0xff]
  %v369 = vld [vmem:[%s8 + $0xa0] sm:$0xff]
  %v370 = vld [vmem:[%s8 + $0xa8] sm:$0xff]
  %v371 = vld [vmem:[%s8 + $0xb0] sm:$0xff]
  %v372 = vld [vmem:[%s8 + $0xb8] sm:$0xff]
  %v373 = vld [vmem:[%s8 + $0xc0] sm:$0xff]
  %v374 = vld [vmem:[%s8 + $0xc8] sm:$0xff]
  %v375 = vld [vmem:[%s8 + $0xd0] sm:$0xff]
  %v376 = vld [vmem:[%s8 + $0xd8] sm:$0xff]
  %v377 = vld [vmem:[%s8 + $0xe0] sm:$0xff]
  %v378 = vld [vmem:[%s8 + $0xe8] sm:$0xff]
  %v379 = vld [vmem:[%s8 + $0xf0] sm:$0xff]
  %v380 = vld [vmem:[%s8 + $0xf8] sm:$0xff]
  %v381 = vld [vmem:[%s9] sm:$0x3]
  %v383 = vlaneseq
  %v384 = vshrl.u32 %v383, 7
  %v385 = vsub.s32 0, %v384
  %v386 = vrot.slane %v381, %v385
  %v387 = vlaneseq
  %v388 = vshrl.u32 %v387, 7
  %v389 = vsub.s32 1, %v388
  %v390 = vrot.slane %v381, %v389
  %393 = vmatprep.subr.mxu0 %v350
  %394 = vmatpush1.msra.mxu0 %v349
  %395 = vmatprep.subr.mxu0 %v352
  %396 = vmatpush1.msra.mxu0 %v351
  %397 = vmatprep.subr.mxu0 %v354
  %398 = vmatpush1.msra.mxu0 %v353
  %399 = vmatprep.subr.mxu0 %v356
  %400 = vmatpush1.msra.mxu0 %v355
  %401 = vmatprep.subr.mxu0 %v358
  %402 = vmatpush1.msra.mxu0 %v357
  %403 = vmatprep.subr.mxu0 %v360
  %404 = vmatpush1.msra.mxu0 %v359
  %405 = vmatprep.subr.mxu0 %v362
  %406 = vmatpush1.msra.mxu0 %v361
  %407 = vmatprep.subr.mxu0 %v364
  %408 = vmatpush1.msra.mxu0 %v363
  %409 = vmatprep.subr.mxu0 %v366
  %410 = vmatpush1.msra.mxu0 %v365
  %411 = vmatprep.subr.mxu0 %v368
  %412 = vmatpush1.msra.mxu0 %v367
  %413 = vmatprep.subr.mxu0 %v370
  %414 = vmatpush1.msra.mxu0 %v369
  %415 = vmatprep.subr.mxu0 %v372
  %416 = vmatpush1.msra.mxu0 %v371
  %417 = vmatprep.subr.mxu0 %v374
  %418 = vmatpush1.msra.mxu0 %v373
  %419 = vmatprep.subr.mxu0 %v376
  %420 = vmatpush1.msra.mxu0 %v375
  %421 = vmatprep.subr.mxu0 %v378
  %422 = vmatpush1.msra.mxu0 %v377
  %423 = vmatprep.subr.mxu0 %v380
  %424 = vmatpush1.msra.mxu0 %v379
  %425 = vmatprep.subr.mxu0 0.0
  %426 = vmatpush1.msra.mxu0 0.0
  %427 = vmatprep.subr.mxu0 0.0
  %428 = vmatpush1.msra.mxu0 0.0
  %429 = vmatprep.subr.mxu0 0.0
  %430 = vmatpush1.msra.mxu0 0.0
  %431 = vmatprep.subr.mxu0 0.0
  %432 = vmatpush1.msra.mxu0 0.0
  %433 = vmatprep.subr.mxu0 0.0
  %434 = vmatpush1.msra.mxu0 0.0
  %435 = vmatprep.subr.mxu0 0.0
  %436 = vmatpush1.msra.mxu0 0.0
  %437 = vmatprep.subr.mxu0 0.0
  %438 = vmatpush1.msra.mxu0 0.0
  %439 = vmatprep.subr.mxu0 0.0
  %440 = vmatpush1.msra.mxu0 0.0
  %441 = vmatprep.subr.mxu0 0.0
  %442 = vmatpush1.msra.mxu0 0.0
  %443 = vmatprep.subr.mxu0 0.0
  %444 = vmatpush1.msra.mxu0 0.0
  %445 = vmatprep.subr.mxu0 0.0
  %446 = vmatpush1.msra.mxu0 0.0
  %447 = vmatprep.subr.mxu0 0.0
  %448 = vmatpush1.msra.mxu0 0.0
  %449 = vmatprep.subr.mxu0 0.0
  %450 = vmatpush1.msra.mxu0 0.0
  %451 = vmatprep.subr.mxu0 0.0
  %452 = vmatpush1.msra.mxu0 0.0
  %453 = vmatprep.subr.mxu0 0.0
  %454 = vmatpush1.msra.mxu0 0.0
  %455 = vmatprep.subr.mxu0 0.0
  %456 = vmatpush1.msra.mxu0 0.0
  %457 = vmatprep.mubr.f32.mxu0 0.0
  %458 = vmatmul.mubr.f32.gmra.mrb[0].mxu0 %v348
  %v459 = vpop.f32.mrb[0].mxu0
  %v460 = vadd.f32 %v386, %v459
  %v461 = vpop.f32.mrb[0].mxu0
  %v462 = vadd.f32 %v390, %v461
  %463 = vdwg.mxu0
  %v464 = vmax.f32 %v460, 0.0
  %v465 = vmax.f32 %v462, 0.0
  %v466 = vld [vmem:[%s10] sm:$0xff]
  %v467 = vld [vmem:[%s10 + $0x8] sm:$0xff]
  %v468 = vld [vmem:[%s10 + $0x10] sm:$0xff]
  %v469 = vld [vmem:[%s10 + $0x18] sm:$0xff]
  %v470 = vld [vmem:[%s10 + $0x20] sm:$0xff]
  %v471 = vld [vmem:[%s10 + $0x28] sm:$0xff]
  %v472 = vld [vmem:[%s10 + $0x30] sm:$0xff]
  %v473 = vld [vmem:[%s10 + $0x38] sm:$0xff]
  %v474 = vld [vmem:[%s10 + $0x40] sm:$0xff]
  %v475 = vld [vmem:[%s10 + $0x48] sm:$0xff]
  %v476 = vld [vmem:[%s10 + $0x50] sm:$0xff]
  %v477 = vld [vmem:[%s10 + $0x58] sm:$0xff]
  %v478 = vld [vmem:[%s10 + $0x60] sm:$0xff]
  %v479 = vld [vmem:[%s10 + $0x68] sm:$0xff]
  %v480 = vld [vmem:[%s10 + $0x70] sm:$0xff]
  %v481 = vld [vmem:[%s10 + $0x78] sm:$0xff]
  %v482 = vld [vmem:[%s10 + $0x80] sm:$0xff]
  %v483 = vld [vmem:[%s10 + $0x88] sm:$0xff]
  %v484 = vld [vmem:[%s10 + $0x90] sm:$0xff]
  %v485 = vld [vmem:[%s10 + $0x98] sm:$0xff]
  %v486 = vld [vmem:[%s10 + $0xa0] sm:$0xff]
  %v487 = vld [vmem:[%s10 + $0xa8] sm:$0xff]
  %v488 = vld [vmem:[%s10 + $0xb0] sm:$0xff]
  %v489 = vld [vmem:[%s10 + $0xb8] sm:$0xff]
  %v490 = vld [vmem:[%s10 + $0xc0] sm:$0xff]
  %v491 = vld [vmem:[%s10 + $0xc8] sm:$0xff]
  %v492 = vld [vmem:[%s10 + $0xd0] sm:$0xff]
  %v493 = vld [vmem:[%s10 + $0xd8] sm:$0xff]
  %v494 = vld [vmem:[%s10 + $0xe0] sm:$0xff]
  %v495 = vld [vmem:[%s10 + $0xe8] sm:$0xff]
  %v496 = vld [vmem:[%s10 + $0xf0] sm:$0xff]
  %v497 = vld [vmem:[%s10 + $0xf8] sm:$0xff]
  %v498 = vld [vmem:[%s10 + $0x100] sm:$0xff]
  %v499 = vld [vmem:[%s10 + $0x108] sm:$0xff]
  %v500 = vld [vmem:[%s10 + $0x110] sm:$0xff]
  %v501 = vld [vmem:[%s10 + $0x118] sm:$0xff]
  %v502 = vld [vmem:[%s10 + $0x120] sm:$0xff]
  %v503 = vld [vmem:[%s10 + $0x128] sm:$0xff]
  %v504 = vld [vmem:[%s10 + $0x130] sm:$0xff]
  %v505 = vld [vmem:[%s10 + $0x138] sm:$0xff]
  %v506 = vld [vmem:[%s10 + $0x140] sm:$0xff]
  %v507 = vld [vmem:[%s10 + $0x148] sm:$0xff]
  %v508 = vld [vmem:[%s10 + $0x150] sm:$0xff]
  %v509 = vld [vmem:[%s10 + $0x158] sm:$0xff]
  %v510 = vld [vmem:[%s10 + $0x160] sm:$0xff]
  %v511 = vld [vmem:[%s10 + $0x168] sm:$0xff]
  %v512 = vld [vmem:[%s10 + $0x170] sm:$0xff]
  %v513 = vld [vmem:[%s10 + $0x178] sm:$0xff]
  %v514 = vld [vmem:[%s10 + $0x180] sm:$0xff]
  %v515 = vld [vmem:[%s10 + $0x188] sm:$0xff]
  %v516 = vld [vmem:[%s10 + $0x190] sm:$0xff]
  %v517 = vld [vmem:[%s10 + $0x198] sm:$0xff]
  %v518 = vld [vmem:[%s10 + $0x1a0] sm:$0xff]
  %v519 = vld [vmem:[%s10 + $0x1a8] sm:$0xff]
  %v520 = vld [vmem:[%s10 + $0x1b0] sm:$0xff]
  %v521 = vld [vmem:[%s10 + $0x1b8] sm:$0xff]
  %v522 = vld [vmem:[%s10 + $0x1c0] sm:$0xff]
  %v523 = vld [vmem:[%s10 + $0x1c8] sm:$0xff]
  %v524 = vld [vmem:[%s10 + $0x1d0] sm:$0xff]
  %v525 = vld [vmem:[%s10 + $0x1d8] sm:$0xff]
  %v526 = vld [vmem:[%s10 + $0x1e0] sm:$0xff]
  %v527 = vld [vmem:[%s10 + $0x1e8] sm:$0xff]
  %v528 = vld [vmem:[%s10 + $0x1f0] sm:$0xff]
  %v529 = vld [vmem:[%s10 + $0x1f8] sm:$0xff]
  %v530 = vld [vmem:[%s11] sm:$0x3]
  %v532 = vlaneseq
  %v533 = vshrl.u32 %v532, 7
  %v534 = vsub.s32 0, %v533
  %v535 = vrot.slane %v530, %v534
  %v536 = vlaneseq
  %v537 = vshrl.u32 %v536, 7
  %v538 = vsub.s32 1, %v537
  %v539 = vrot.slane %v530, %v538
  %542 = vmatprep.subr.mxu0 %v467
  %543 = vmatpush1.msra.mxu0 %v466
  %544 = vmatprep.subr.mxu0 %v469
  %545 = vmatpush1.msra.mxu0 %v468
  %546 = vmatprep.subr.mxu0 %v471
  %547 = vmatpush1.msra.mxu0 %v470
  %548 = vmatprep.subr.mxu0 %v473
  %549 = vmatpush1.msra.mxu0 %v472
  %550 = vmatprep.subr.mxu0 %v475
  %551 = vmatpush1.msra.mxu0 %v474
  %552 = vmatprep.subr.mxu0 %v477
  %553 = vmatpush1.msra.mxu0 %v476
  %554 = vmatprep.subr.mxu0 %v479
  %555 = vmatpush1.msra.mxu0 %v478
  %556 = vmatprep.subr.mxu0 %v481
  %557 = vmatpush1.msra.mxu0 %v480
  %558 = vmatprep.subr.mxu0 %v483
  %559 = vmatpush1.msra.mxu0 %v482
  %560 = vmatprep.subr.mxu0 %v485
  %561 = vmatpush1.msra.mxu0 %v484
  %562 = vmatprep.subr.mxu0 %v487
  %563 = vmatpush1.msra.mxu0 %v486
  %564 = vmatprep.subr.mxu0 %v489
  %565 = vmatpush1.msra.mxu0 %v488
  %566 = vmatprep.subr.mxu0 %v491
  %567 = vmatpush1.msra.mxu0 %v490
  %568 = vmatprep.subr.mxu0 %v493
  %569 = vmatpush1.msra.mxu0 %v492
  %570 = vmatprep.subr.mxu0 %v495
  %571 = vmatpush1.msra.mxu0 %v494
  %572 = vmatprep.subr.mxu0 %v497
  %573 = vmatpush1.msra.mxu0 %v496
  %574 = vmatprep.subr.mxu0 %v499
  %575 = vmatpush1.msra.mxu0 %v498
  %576 = vmatprep.subr.mxu0 %v501
  %577 = vmatpush1.msra.mxu0 %v500
  %578 = vmatprep.subr.mxu0 %v503
  %579 = vmatpush1.msra.mxu0 %v502
  %580 = vmatprep.subr.mxu0 %v505
  %581 = vmatpush1.msra.mxu0 %v504
  %582 = vmatprep.subr.mxu0 %v507
  %583 = vmatpush1.msra.mxu0 %v506
  %584 = vmatprep.subr.mxu0 %v509
  %585 = vmatpush1.msra.mxu0 %v508
  %586 = vmatprep.subr.mxu0 %v511
  %587 = vmatpush1.msra.mxu0 %v510
  %588 = vmatprep.subr.mxu0 %v513
  %589 = vmatpush1.msra.mxu0 %v512
  %590 = vmatprep.subr.mxu0 %v515
  %591 = vmatpush1.msra.mxu0 %v514
  %592 = vmatprep.subr.mxu0 %v517
  %593 = vmatpush1.msra.mxu0 %v516
  %594 = vmatprep.subr.mxu0 %v519
  %595 = vmatpush1.msra.mxu0 %v518
  %596 = vmatprep.subr.mxu0 %v521
  %597 = vmatpush1.msra.mxu0 %v520
  %598 = vmatprep.subr.mxu0 %v523
  %599 = vmatpush1.msra.mxu0 %v522
  %600 = vmatprep.subr.mxu0 %v525
  %601 = vmatpush1.msra.mxu0 %v524
  %602 = vmatprep.subr.mxu0 %v527
  %603 = vmatpush1.msra.mxu0 %v526
  %604 = vmatprep.subr.mxu0 %v529
  %605 = vmatpush1.msra.mxu0 %v528
  %606 = vmatprep.mubr.f32.mxu0 %v465
  %607 = vmatmul.mubr.f32.gmra.mrb[0].mxu0 %v464
  %v608 = vpop.f32.mrb[0].mxu0
  %v609 = vadd.f32 %v535, %v608
  %v610 = vpop.f32.mrb[0].mxu0
  %v611 = vadd.f32 %v539, %v610
  %612 = vdwg.mxu0
  %v613 = vmax.f32 %v609, 0.0
  %v614 = vld [vmem:[%s12] sm:$0xff]
  %v615 = vld [vmem:[%s12 + $0x8] sm:$0xff]
  %v616 = vld [vmem:[%s12 + $0x10] sm:$0xff]
  %v617 = vld [vmem:[%s12 + $0x18] sm:$0xff]
  %v618 = vld [vmem:[%s12 + $0x20] sm:$0xff]
  %v619 = vld [vmem:[%s12 + $0x28] sm:$0xff]
  %v620 = vld [vmem:[%s12 + $0x30] sm:$0xff]
  %v621 = vld [vmem:[%s12 + $0x38] sm:$0xff]
  %v622 = vld [vmem:[%s12 + $0x40] sm:$0xff]
  %v623 = vld [vmem:[%s12 + $0x48] sm:$0xff]
  %v624 = vld [vmem:[%s12 + $0x50] sm:$0xff]
  %v625 = vld [vmem:[%s12 + $0x58] sm:$0xff]
  %v626 = vld [vmem:[%s12 + $0x60] sm:$0xff]
  %v627 = vld [vmem:[%s12 + $0x68] sm:$0xff]
  %v628 = vld [vmem:[%s12 + $0x70] sm:$0xff]
  %v629 = vld [vmem:[%s12 + $0x78] sm:$0xff]
  %v630 = vld [vmem:[%s13] sm:$0x1]
  %v632 = vlaneseq
  %v633 = vshrl.u32 %v632, 7
  %v634 = vsub.s32 0, %v633
  %v635 = vrot.slane %v630, %v634
  %637 = vmatprep.subr.mxu0 0.0
  %638 = vmatpush1.msra.mxu0 %v614
  %639 = vmatprep.subr.mxu0 0.0
  %640 = vmatpush1.msra.mxu0 %v615
  %641 = vmatprep.subr.mxu0 0.0
  %642 = vmatpush1.msra.mxu0 %v616
  %643 = vmatprep.subr.mxu0 0.0
  %644 = vmatpush1.msra.mxu0 %v617
  %645 = vmatprep.subr.mxu0 0.0
  %646 = vmatpush1.msra.mxu0 %v618
  %647 = vmatprep.subr.mxu0 0.0
  %648 = vmatpush1.msra.mxu0 %v619
  %649 = vmatprep.subr.mxu0 0.0
  %650 = vmatpush1.msra.mxu0 %v620
  %651 = vmatprep.subr.mxu0 0.0
  %652 = vmatpush1.msra.mxu0 %v621
  %653 = vmatprep.subr.mxu0 0.0
  %654 = vmatpush1.msra.mxu0 %v622
  %655 = vmatprep.subr.mxu0 0.0
  %656 = vmatpush1.msra.mxu0 %v623
  %657 = vmatprep.subr.mxu0 0.0
  %658 = vmatpush1.msra.mxu0 %v624
  %659 = vmatprep.subr.mxu0 0.0
  %660 = vmatpush1.msra.mxu0 %v625
  %661 = vmatprep.subr.mxu0 0.0
  %662 = vmatpush1.msra.mxu0 %v626
  %663 = vmatprep.subr.mxu0 0.0
  %664 = vmatpush1.msra.mxu0 %v627
  %665 = vmatprep.subr.mxu0 0.0
  %666 = vmatpush1.msra.mxu0 %v628
  %667 = vmatprep.subr.mxu0 0.0
  %668 = vmatpush1.msra.mxu0 %v629
  %669 = vmatprep.subr.mxu0 0.0
  %670 = vmatpush1.msra.mxu0 0.0
  %671 = vmatprep.subr.mxu0 0.0
  %672 = vmatpush1.msra.mxu0 0.0
  %673 = vmatprep.subr.mxu0 0.0
  %674 = vmatpush1.msra.mxu0 0.0
  %675 = vmatprep.subr.mxu0 0.0
  %676 = vmatpush1.msra.mxu0 0.0
  %677 = vmatprep.subr.mxu0 0.0
  %678 = vmatpush1.msra.mxu0 0.0
  %679 = vmatprep.subr.mxu0 0.0
  %680 = vmatpush1.msra.mxu0 0.0
  %681 = vmatprep.subr.mxu0 0.0
  %682 = vmatpush1.msra.mxu0 0.0
  %683 = vmatprep.subr.mxu0 0.0
  %684 = vmatpush1.msra.mxu0 0.0
  %685 = vmatprep.subr.mxu0 0.0
  %686 = vmatpush1.msra.mxu0 0.0
  %687 = vmatprep.subr.mxu0 0.0
  %688 = vmatpush1.msra.mxu0 0.0
  %689 = vmatprep.subr.mxu0 0.0
  %690 = vmatpush1.msra.mxu0 0.0
  %691 = vmatprep.subr.mxu0 0.0
  %692 = vmatpush1.msra.mxu0 0.0
  %693 = vmatprep.subr.mxu0 0.0
  %694 = vmatpush1.msra.mxu0 0.0
  %695 = vmatprep.subr.mxu0 0.0
  %696 = vmatpush1.msra.mxu0 0.0
  %697 = vmatprep.subr.mxu0 0.0
  %698 = vmatpush1.msra.mxu0 0.0
  %699 = vmatprep.subr.mxu0 0.0
  %700 = vmatpush1.msra.mxu0 0.0
  %701 = vmatprep.mubr.f32.mxu0 0.0
  %702 = vmatmul.mubr.f32.gmra.mrb[0].mxu0 %v613
  %v703 = vpop.f32.mrb[0].mxu0
  %v704 = vadd.f32 %v635, %v703
  %v705 = vpop.f32.mrb[0].mxu0
  %706 = vdwg.mxu0
  %707 = vst [vmem:[%s14] sm:$0xff] %v704
  %708 = vst [vmem:[%s14 + $0x8] sm:$0xff] %v339
  %709 = vst [vmem:[%s14 + $0x10] sm:$0xff] %v341
  %710 = vst [vmem:[%s14 + $0x18] sm:$0xff] %v611
  // Predicated region
  $region58: #{supervised_vae_forward.1} parent=0 // pred_check
    _
  $region59: #{supervised_vae_forward.1} parent=0 // pred_check_branch
    %712 = sbr.rel (0) target = $region61
  $region60: #{supervised_vae_forward.1} parent=0 // pred_region
    _
  $region61: #{supervised_vae_forward.1} parent=0 // pred_fallthru
    _
  // Predicated region
  $region62: #{supervised_vae_forward.1} parent=0 // pred_check
    _
  $region63: #{supervised_vae_forward.1} parent=0 // pred_check_branch
    %714 = sbr.rel (0) target = $region65
  $region64: #{supervised_vae_forward.1} parent=0 // pred_region
    _
  $region65: #{supervised_vae_forward.1} parent=0 // pred_fallthru
    _

</llo_original>
